<compile_context>
chip_gen: v5e
topology: v5e:2x2
jax: 0.10.0
libtpu: 0.0.40
codegen_flags: <defaults>
</compile_context>

<pallas_src>
import jax
import jax.numpy as jnp
from jax.experimental import pallas as pl
from jax.experimental.pallas import tpu as pltpu

IN_DIM = 6  # input / hidden width of the V network


def caltech_fan_kernel(w1_ref, b1_ref, w2_ref, b2_ref, x_ref, o_ref):
    # w1_ref: (36,) SMEM  -- W1 flattened row-major, (out, in) = (6, 6)
    # b1_ref: (6,)  SMEM
    # w2_ref: (6,)  SMEM  -- W2 (1, 6) flattened
    # b2_ref: (1,)  SMEM
    # x_ref : (6, TILE_B) VMEM        o_ref: (1, TILE_B) VMEM
    x = x_ref[...].astype(jnp.float32)          # (6, TILE_B)
    tile_b = x.shape[1]
    v = jnp.zeros((1, tile_b), jnp.float32)
    for i in range(IN_DIM):
        # Layer 1, unit i:  h_i[:,lane] = tanh( sum_k W1[i,k] * x[k,lane] + b1[i] )
        acc = x[0:1, :] * w1_ref[i * IN_DIM + 0]
        for k in range(1, IN_DIM):
            acc = acc + x[k:k + 1, :] * w1_ref[i * IN_DIM + k]
        h_i = jnp.tanh(acc + b1_ref[i])
        # Layer 2 folded in:  v += W2[0,i] * h_i
        v = v + h_i * w2_ref[i]
    o_ref[...] = jnp.tanh(v + b2_ref[0]).astype(o_ref.dtype)


def _round_up(n, m):
    return ((n + m - 1) // m) * m


def caltech_fan_forward(x, w1, b1, w2, b2, *, tile_b=1024):
    """x: (B, 6) f32; w1: (6, 6); b1: (6,); w2: (1, 6); b2: (1,) -> (B, 1)."""
    B = x.shape[0]
    # Lane-align the batch tile; don't pad tiny batches all the way up to the
    # default production tile.
    tile_b = _round_up(tile_b, 128)
    tile_b = max(128, min(tile_b, _round_up(B, 128)))
    Bp = _round_up(B, tile_b)

    # Lane-dense layout: batch on the last (lane) axis, zero-padded tail.
    xt = jnp.zeros((IN_DIM, Bp), x.dtype).at[:, :B].set(x.T)

    out = pl.pallas_call(
        caltech_fan_kernel,
        out_shape=jax.ShapeDtypeStruct((1, Bp), x.dtype),
        grid=(Bp // tile_b,),
        in_specs=[
            pl.BlockSpec(memory_space=pltpu.MemorySpace.SMEM),  # W1 flat (36,)
            pl.BlockSpec(memory_space=pltpu.MemorySpace.SMEM),  # b1 (6,)
            pl.BlockSpec(memory_space=pltpu.MemorySpace.SMEM),  # W2 flat (6,)
            pl.BlockSpec(memory_space=pltpu.MemorySpace.SMEM),  # b2 (1,)
            pl.BlockSpec((IN_DIM, tile_b), lambda i: (0, i)),   # x tile
        ],
        out_specs=pl.BlockSpec((1, tile_b), lambda i: (0, i)),
        compiler_params=pltpu.CompilerParams(
            dimension_semantics=("parallel",)),
    )(
        w1.reshape(-1).astype(jnp.float32),
        b1.reshape(-1).astype(jnp.float32),
        w2.reshape(-1).astype(jnp.float32),
        b2.reshape(-1).astype(jnp.float32),
        xt,
    )
    # Back to the PyTorch (B, 1) layout; drop the padded tail.
    return out[:, :B].T


def _reference(x, w1, b1, w2, b2):
    h = jnp.tanh(x @ w1.T + b1)
    return jnp.tanh(h @ w2.T + b2)


if __name__ == "__main__":
    key = jax.random.PRNGKey(0)
    kx, k1, k2, k3, k4 = jax.random.split(key, 5)

    B = 8
    # Deterministic synthetic parameters (PyTorch-style uniform init bounds).
    bound1 = 1.0 / jnp.sqrt(6.0)
    w1 = jax.random.uniform(k1, (6, 6), jnp.float32, -bound1, bound1)
    b1 = jax.random.uniform(k2, (6,), jnp.float32, -bound1, bound1)
    w2 = jax.random.uniform(k3, (1, 6), jnp.float32, -bound1, bound1)
    b2 = jax.random.uniform(k4, (1,), jnp.float32, -bound1, bound1)

    x = jax.random.normal(kx, (B, 6), jnp.float32)

    out = caltech_fan_forward(x, w1, b1, w2, b2)
    out = jax.block_until_ready(out)

    ref = _reference(x, w1, b1, w2, b2)
    assert out.shape == (B, 1)
    assert jnp.allclose(out, ref, atol=1e-5, rtol=1e-5)

    print("KERNEL_OK")
</pallas_src>

<mosaic_0001>
module attributes {stable_mosaic.version = 11 : i64} {
  func.func @caltech_fan_kernel(%arg0: i32, %arg1: memref<36xf32, #tpu.memory_space<smem>>, %arg2: memref<6xf32, #tpu.memory_space<smem>>, %arg3: memref<6xf32, #tpu.memory_space<smem>>, %arg4: memref<1xf32, #tpu.memory_space<smem>>, %arg5: memref<6x128xf32, #tpu.memory_space<vmem>>, %arg6: memref<1x128xf32, #tpu.memory_space<vmem>>) attributes {dimension_semantics = [#tpu.dimension_semantics<parallel>], iteration_bounds = array<i64: 1>, scalar_prefetch = 0 : i64, scratch_operands = 0 : i64, tpu.core_type = #tpu.core_type<tc>, window_params = [{transform_indices = @transform_0, window_bounds = array<i64: 36>}, {transform_indices = @transform_1, window_bounds = array<i64: 6>}, {transform_indices = @transform_2, window_bounds = array<i64: 6>}, {transform_indices = @transform_3, window_bounds = array<i64: 1>}, {transform_indices = @transform_4, window_bounds = array<i64: 6, 128>}, {transform_indices = @transform_5, window_bounds = array<i64: 1, 128>}]} {
    %c0 = arith.constant 0 : index
    %c0_0 = arith.constant 0 : index
    %0 = vector.load %arg5[%c0, %c0_0] : memref<6x128xf32, #tpu.memory_space<vmem>>, vector<6x128xf32>
    %cst = arith.constant 0.000000e+00 : f32
    %1 = vector.broadcast %cst : f32 to vector<1x128xf32>
    %2 = vector.extract_strided_slice %0 {offsets = [0, 0], sizes = [1, 128], strides = [1, 1]} : vector<6x128xf32> to vector<1x128xf32>
    %c0_1 = arith.constant 0 : index
    %3 = memref.load %arg1[%c0_1] : memref<36xf32, #tpu.memory_space<smem>>
    %4 = vector.broadcast %3 : f32 to vector<1x128xf32>
    %5 = arith.mulf %2, %4 : vector<1x128xf32>
    %6 = vector.extract_strided_slice %0 {offsets = [1, 0], sizes = [1, 128], strides = [1, 1]} : vector<6x128xf32> to vector<1x128xf32>
    %c1 = arith.constant 1 : index
    %7 = memref.load %arg1[%c1] : memref<36xf32, #tpu.memory_space<smem>>
    %8 = vector.broadcast %7 : f32 to vector<1x128xf32>
    %9 = arith.mulf %6, %8 : vector<1x128xf32>
    %10 = arith.addf %5, %9 : vector<1x128xf32>
    %11 = vector.extract_strided_slice %0 {offsets = [2, 0], sizes = [1, 128], strides = [1, 1]} : vector<6x128xf32> to vector<1x128xf32>
    %c2 = arith.constant 2 : index
    %12 = memref.load %arg1[%c2] : memref<36xf32, #tpu.memory_space<smem>>
    %13 = vector.broadcast %12 : f32 to vector<1x128xf32>
    %14 = arith.mulf %11, %13 : vector<1x128xf32>
    %15 = arith.addf %10, %14 : vector<1x128xf32>
    %16 = vector.extract_strided_slice %0 {offsets = [3, 0], sizes = [1, 128], strides = [1, 1]} : vector<6x128xf32> to vector<1x128xf32>
    %c3 = arith.constant 3 : index
    %17 = memref.load %arg1[%c3] : memref<36xf32, #tpu.memory_space<smem>>
    %18 = vector.broadcast %17 : f32 to vector<1x128xf32>
    %19 = arith.mulf %16, %18 : vector<1x128xf32>
    %20 = arith.addf %15, %19 : vector<1x128xf32>
    %21 = vector.extract_strided_slice %0 {offsets = [4, 0], sizes = [1, 128], strides = [1, 1]} : vector<6x128xf32> to vector<1x128xf32>
    %c4 = arith.constant 4 : index
    %22 = memref.load %arg1[%c4] : memref<36xf32, #tpu.memory_space<smem>>
    %23 = vector.broadcast %22 : f32 to vector<1x128xf32>
    %24 = arith.mulf %21, %23 : vector<1x128xf32>
    %25 = arith.addf %20, %24 : vector<1x128xf32>
    %26 = vector.extract_strided_slice %0 {offsets = [5, 0], sizes = [1, 128], strides = [1, 1]} : vector<6x128xf32> to vector<1x128xf32>
    %c5 = arith.constant 5 : index
    %27 = memref.load %arg1[%c5] : memref<36xf32, #tpu.memory_space<smem>>
    %28 = vector.broadcast %27 : f32 to vector<1x128xf32>
    %29 = arith.mulf %26, %28 : vector<1x128xf32>
    %30 = arith.addf %25, %29 : vector<1x128xf32>
    %c0_2 = arith.constant 0 : index
    %31 = memref.load %arg2[%c0_2] : memref<6xf32, #tpu.memory_space<smem>>
    %32 = vector.broadcast %31 : f32 to vector<1x128xf32>
    %33 = arith.addf %30, %32 : vector<1x128xf32>
    %34 = math.tanh %33 : vector<1x128xf32>
    %c0_3 = arith.constant 0 : index
    %35 = memref.load %arg3[%c0_3] : memref<6xf32, #tpu.memory_space<smem>>
    %36 = vector.broadcast %35 : f32 to vector<1x128xf32>
    %37 = arith.mulf %34, %36 : vector<1x128xf32>
    %38 = arith.addf %1, %37 : vector<1x128xf32>
    %39 = vector.extract_strided_slice %0 {offsets = [0, 0], sizes = [1, 128], strides = [1, 1]} : vector<6x128xf32> to vector<1x128xf32>
    %c6 = arith.constant 6 : index
    %40 = memref.load %arg1[%c6] : memref<36xf32, #tpu.memory_space<smem>>
    %41 = vector.broadcast %40 : f32 to vector<1x128xf32>
    %42 = arith.mulf %39, %41 : vector<1x128xf32>
    %43 = vector.extract_strided_slice %0 {offsets = [1, 0], sizes = [1, 128], strides = [1, 1]} : vector<6x128xf32> to vector<1x128xf32>
    %c7 = arith.constant 7 : index
    %44 = memref.load %arg1[%c7] : memref<36xf32, #tpu.memory_space<smem>>
    %45 = vector.broadcast %44 : f32 to vector<1x128xf32>
    %46 = arith.mulf %43, %45 : vector<1x128xf32>
    %47 = arith.addf %42, %46 : vector<1x128xf32>
    %48 = vector.extract_strided_slice %0 {offsets = [2, 0], sizes = [1, 128], strides = [1, 1]} : vector<6x128xf32> to vector<1x128xf32>
    %c8 = arith.constant 8 : index
    %49 = memref.load %arg1[%c8] : memref<36xf32, #tpu.memory_space<smem>>
    %50 = vector.broadcast %49 : f32 to vector<1x128xf32>
    %51 = arith.mulf %48, %50 : vector<1x128xf32>
    %52 = arith.addf %47, %51 : vector<1x128xf32>
    %53 = vector.extract_strided_slice %0 {offsets = [3, 0], sizes = [1, 128], strides = [1, 1]} : vector<6x128xf32> to vector<1x128xf32>
    %c9 = arith.constant 9 : index
    %54 = memref.load %arg1[%c9] : memref<36xf32, #tpu.memory_space<smem>>
    %55 = vector.broadcast %54 : f32 to vector<1x128xf32>
    %56 = arith.mulf %53, %55 : vector<1x128xf32>
    %57 = arith.addf %52, %56 : vector<1x128xf32>
    %58 = vector.extract_strided_slice %0 {offsets = [4, 0], sizes = [1, 128], strides = [1, 1]} : vector<6x128xf32> to vector<1x128xf32>
    %c10 = arith.constant 10 : index
    %59 = memref.load %arg1[%c10] : memref<36xf32, #tpu.memory_space<smem>>
    %60 = vector.broadcast %59 : f32 to vector<1x128xf32>
    %61 = arith.mulf %58, %60 : vector<1x128xf32>
    %62 = arith.addf %57, %61 : vector<1x128xf32>
    %63 = vector.extract_strided_slice %0 {offsets = [5, 0], sizes = [1, 128], strides = [1, 1]} : vector<6x128xf32> to vector<1x128xf32>
    %c11 = arith.constant 11 : index
    %64 = memref.load %arg1[%c11] : memref<36xf32, #tpu.memory_space<smem>>
    %65 = vector.broadcast %64 : f32 to vector<1x128xf32>
    %66 = arith.mulf %63, %65 : vector<1x128xf32>
    %67 = arith.addf %62, %66 : vector<1x128xf32>
    %c1_4 = arith.constant 1 : index
    %68 = memref.load %arg2[%c1_4] : memref<6xf32, #tpu.memory_space<smem>>
    %69 = vector.broadcast %68 : f32 to vector<1x128xf32>
    %70 = arith.addf %67, %69 : vector<1x128xf32>
    %71 = math.tanh %70 : vector<1x128xf32>
    %c1_5 = arith.constant 1 : index
    %72 = memref.load %arg3[%c1_5] : memref<6xf32, #tpu.memory_space<smem>>
    %73 = vector.broadcast %72 : f32 to vector<1x128xf32>
    %74 = arith.mulf %71, %73 : vector<1x128xf32>
    %75 = arith.addf %38, %74 : vector<1x128xf32>
    %76 = vector.extract_strided_slice %0 {offsets = [0, 0], sizes = [1, 128], strides = [1, 1]} : vector<6x128xf32> to vector<1x128xf32>
    %c12 = arith.constant 12 : index
    %77 = memref.load %arg1[%c12] : memref<36xf32, #tpu.memory_space<smem>>
    %78 = vector.broadcast %77 : f32 to vector<1x128xf32>
    %79 = arith.mulf %76, %78 : vector<1x128xf32>
    %80 = vector.extract_strided_slice %0 {offsets = [1, 0], sizes = [1, 128], strides = [1, 1]} : vector<6x128xf32> to vector<1x128xf32>
    %c13 = arith.constant 13 : index
    %81 = memref.load %arg1[%c13] : memref<36xf32, #tpu.memory_space<smem>>
    %82 = vector.broadcast %81 : f32 to vector<1x128xf32>
    %83 = arith.mulf %80, %82 : vector<1x128xf32>
    %84 = arith.addf %79, %83 : vector<1x128xf32>
    %85 = vector.extract_strided_slice %0 {offsets = [2, 0], sizes = [1, 128], strides = [1, 1]} : vector<6x128xf32> to vector<1x128xf32>
    %c14 = arith.constant 14 : index
    %86 = memref.load %arg1[%c14] : memref<36xf32, #tpu.memory_space<smem>>
    %87 = vector.broadcast %86 : f32 to vector<1x128xf32>
    %88 = arith.mulf %85, %87 : vector<1x128xf32>
    %89 = arith.addf %84, %88 : vector<1x128xf32>
    %90 = vector.extract_strided_slice %0 {offsets = [3, 0], sizes = [1, 128], strides = [1, 1]} : vector<6x128xf32> to vector<1x128xf32>
    %c15 = arith.constant 15 : index
    %91 = memref.load %arg1[%c15] : memref<36xf32, #tpu.memory_space<smem>>
    %92 = vector.broadcast %91 : f32 to vector<1x128xf32>
    %93 = arith.mulf %90, %92 : vector<1x128xf32>
    %94 = arith.addf %89, %93 : vector<1x128xf32>
    %95 = vector.extract_strided_slice %0 {offsets = [4, 0], sizes = [1, 128], strides = [1, 1]} : vector<6x128xf32> to vector<1x128xf32>
    %c16 = arith.constant 16 : index
    %96 = memref.load %arg1[%c16] : memref<36xf32, #tpu.memory_space<smem>>
    %97 = vector.broadcast %96 : f32 to vector<1x128xf32>
    %98 = arith.mulf %95, %97 : vector<1x128xf32>
    %99 = arith.addf %94, %98 : vector<1x128xf32>
    %100 = vector.extract_strided_slice %0 {offsets = [5, 0], sizes = [1, 128], strides = [1, 1]} : vector<6x128xf32> to vector<1x128xf32>
    %c17 = arith.constant 17 : index
    %101 = memref.load %arg1[%c17] : memref<36xf32, #tpu.memory_space<smem>>
    %102 = vector.broadcast %101 : f32 to vector<1x128xf32>
    %103 = arith.mulf %100, %102 : vector<1x128xf32>
    %104 = arith.addf %99, %103 : vector<1x128xf32>
    %c2_6 = arith.constant 2 : index
    %105 = memref.load %arg2[%c2_6] : memref<6xf32, #tpu.memory_space<smem>>
    %106 = vector.broadcast %105 : f32 to vector<1x128xf32>
    %107 = arith.addf %104, %106 : vector<1x128xf32>
    %108 = math.tanh %107 : vector<1x128xf32>
    %c2_7 = arith.constant 2 : index
    %109 = memref.load %arg3[%c2_7] : memref<6xf32, #tpu.memory_space<smem>>
    %110 = vector.broadcast %109 : f32 to vector<1x128xf32>
    %111 = arith.mulf %108, %110 : vector<1x128xf32>
    %112 = arith.addf %75, %111 : vector<1x128xf32>
    %113 = vector.extract_strided_slice %0 {offsets = [0, 0], sizes = [1, 128], strides = [1, 1]} : vector<6x128xf32> to vector<1x128xf32>
    %c18 = arith.constant 18 : index
    %114 = memref.load %arg1[%c18] : memref<36xf32, #tpu.memory_space<smem>>
    %115 = vector.broadcast %114 : f32 to vector<1x128xf32>
    %116 = arith.mulf %113, %115 : vector<1x128xf32>
    %117 = vector.extract_strided_slice %0 {offsets = [1, 0], sizes = [1, 128], strides = [1, 1]} : vector<6x128xf32> to vector<1x128xf32>
    %c19 = arith.constant 19 : index
    %118 = memref.load %arg1[%c19] : memref<36xf32, #tpu.memory_space<smem>>
    %119 = vector.broadcast %118 : f32 to vector<1x128xf32>
    %120 = arith.mulf %117, %119 : vector<1x128xf32>
    %121 = arith.addf %116, %120 : vector<1x128xf32>
    %122 = vector.extract_strided_slice %0 {offsets = [2, 0], sizes = [1, 128], strides = [1, 1]} : vector<6x128xf32> to vector<1x128xf32>
    %c20 = arith.constant 20 : index
    %123 = memref.load %arg1[%c20] : memref<36xf32, #tpu.memory_space<smem>>
    %124 = vector.broadcast %123 : f32 to vector<1x128xf32>
    %125 = arith.mulf %122, %124 : vector<1x128xf32>
    %126 = arith.addf %121, %125 : vector<1x128xf32>
    %127 = vector.extract_strided_slice %0 {offsets = [3, 0], sizes = [1, 128], strides = [1, 1]} : vector<6x128xf32> to vector<1x128xf32>
    %c21 = arith.constant 21 : index
    %128 = memref.load %arg1[%c21] : memref<36xf32, #tpu.memory_space<smem>>
    %129 = vector.broadcast %128 : f32 to vector<1x128xf32>
    %130 = arith.mulf %127, %129 : vector<1x128xf32>
    %131 = arith.addf %126, %130 : vector<1x128xf32>
    %132 = vector.extract_strided_slice %0 {offsets = [4, 0], sizes = [1, 128], strides = [1, 1]} : vector<6x128xf32> to vector<1x128xf32>
    %c22 = arith.constant 22 : index
    %133 = memref.load %arg1[%c22] : memref<36xf32, #tpu.memory_space<smem>>
    %134 = vector.broadcast %133 : f32 to vector<1x128xf32>
    %135 = arith.mulf %132, %134 : vector<1x128xf32>
    %136 = arith.addf %131, %135 : vector<1x128xf32>
    %137 = vector.extract_strided_slice %0 {offsets = [5, 0], sizes = [1, 128], strides = [1, 1]} : vector<6x128xf32> to vector<1x128xf32>
    %c23 = arith.constant 23 : index
    %138 = memref.load %arg1[%c23] : memref<36xf32, #tpu.memory_space<smem>>
    %139 = vector.broadcast %138 : f32 to vector<1x128xf32>
    %140 = arith.mulf %137, %139 : vector<1x128xf32>
    %141 = arith.addf %136, %140 : vector<1x128xf32>
    %c3_8 = arith.constant 3 : index
    %142 = memref.load %arg2[%c3_8] : memref<6xf32, #tpu.memory_space<smem>>
    %143 = vector.broadcast %142 : f32 to vector<1x128xf32>
    %144 = arith.addf %141, %143 : vector<1x128xf32>
    %145 = math.tanh %144 : vector<1x128xf32>
    %c3_9 = arith.constant 3 : index
    %146 = memref.load %arg3[%c3_9] : memref<6xf32, #tpu.memory_space<smem>>
    %147 = vector.broadcast %146 : f32 to vector<1x128xf32>
    %148 = arith.mulf %145, %147 : vector<1x128xf32>
    %149 = arith.addf %112, %148 : vector<1x128xf32>
    %150 = vector.extract_strided_slice %0 {offsets = [0, 0], sizes = [1, 128], strides = [1, 1]} : vector<6x128xf32> to vector<1x128xf32>
    %c24 = arith.constant 24 : index
    %151 = memref.load %arg1[%c24] : memref<36xf32, #tpu.memory_space<smem>>
    %152 = vector.broadcast %151 : f32 to vector<1x128xf32>
    %153 = arith.mulf %150, %152 : vector<1x128xf32>
    %154 = vector.extract_strided_slice %0 {offsets = [1, 0], sizes = [1, 128], strides = [1, 1]} : vector<6x128xf32> to vector<1x128xf32>
    %c25 = arith.constant 25 : index
    %155 = memref.load %arg1[%c25] : memref<36xf32, #tpu.memory_space<smem>>
    %156 = vector.broadcast %155 : f32 to vector<1x128xf32>
    %157 = arith.mulf %154, %156 : vector<1x128xf32>
    %158 = arith.addf %153, %157 : vector<1x128xf32>
    %159 = vector.extract_strided_slice %0 {offsets = [2, 0], sizes = [1, 128], strides = [1, 1]} : vector<6x128xf32> to vector<1x128xf32>
    %c26 = arith.constant 26 : index
    %160 = memref.load %arg1[%c26] : memref<36xf32, #tpu.memory_space<smem>>
    %161 = vector.broadcast %160 : f32 to vector<1x128xf32>
    %162 = arith.mulf %159, %161 : vector<1x128xf32>
    %163 = arith.addf %158, %162 : vector<1x128xf32>
    %164 = vector.extract_strided_slice %0 {offsets = [3, 0], sizes = [1, 128], strides = [1, 1]} : vector<6x128xf32> to vector<1x128xf32>
    %c27 = arith.constant 27 : index
    %165 = memref.load %arg1[%c27] : memref<36xf32, #tpu.memory_space<smem>>
    %166 = vector.broadcast %165 : f32 to vector<1x128xf32>
    %167 = arith.mulf %164, %166 : vector<1x128xf32>
    %168 = arith.addf %163, %167 : vector<1x128xf32>
    %169 = vector.extract_strided_slice %0 {offsets = [4, 0], sizes = [1, 128], strides = [1, 1]} : vector<6x128xf32> to vector<1x128xf32>
    %c28 = arith.constant 28 : index
    %170 = memref.load %arg1[%c28] : memref<36xf32, #tpu.memory_space<smem>>
    %171 = vector.broadcast %170 : f32 to vector<1x128xf32>
    %172 = arith.mulf %169, %171 : vector<1x128xf32>
    %173 = arith.addf %168, %172 : vector<1x128xf32>
    %174 = vector.extract_strided_slice %0 {offsets = [5, 0], sizes = [1, 128], strides = [1, 1]} : vector<6x128xf32> to vector<1x128xf32>
    %c29 = arith.constant 29 : index
    %175 = memref.load %arg1[%c29] : memref<36xf32, #tpu.memory_space<smem>>
    %176 = vector.broadcast %175 : f32 to vector<1x128xf32>
    %177 = arith.mulf %174, %176 : vector<1x128xf32>
    %178 = arith.addf %173, %177 : vector<1x128xf32>
    %c4_10 = arith.constant 4 : index
    %179 = memref.load %arg2[%c4_10] : memref<6xf32, #tpu.memory_space<smem>>
    %180 = vector.broadcast %179 : f32 to vector<1x128xf32>
    %181 = arith.addf %178, %180 : vector<1x128xf32>
    %182 = math.tanh %181 : vector<1x128xf32>
    %c4_11 = arith.constant 4 : index
    %183 = memref.load %arg3[%c4_11] : memref<6xf32, #tpu.memory_space<smem>>
    %184 = vector.broadcast %183 : f32 to vector<1x128xf32>
    %185 = arith.mulf %182, %184 : vector<1x128xf32>
    %186 = arith.addf %149, %185 : vector<1x128xf32>
    %187 = vector.extract_strided_slice %0 {offsets = [0, 0], sizes = [1, 128], strides = [1, 1]} : vector<6x128xf32> to vector<1x128xf32>
    %c30 = arith.constant 30 : index
    %188 = memref.load %arg1[%c30] : memref<36xf32, #tpu.memory_space<smem>>
    %189 = vector.broadcast %188 : f32 to vector<1x128xf32>
    %190 = arith.mulf %187, %189 : vector<1x128xf32>
    %191 = vector.extract_strided_slice %0 {offsets = [1, 0], sizes = [1, 128], strides = [1, 1]} : vector<6x128xf32> to vector<1x128xf32>
    %c31 = arith.constant 31 : index
    %192 = memref.load %arg1[%c31] : memref<36xf32, #tpu.memory_space<smem>>
    %193 = vector.broadcast %192 : f32 to vector<1x128xf32>
    %194 = arith.mulf %191, %193 : vector<1x128xf32>
    %195 = arith.addf %190, %194 : vector<1x128xf32>
    %196 = vector.extract_strided_slice %0 {offsets = [2, 0], sizes = [1, 128], strides = [1, 1]} : vector<6x128xf32> to vector<1x128xf32>
    %c32 = arith.constant 32 : index
    %197 = memref.load %arg1[%c32] : memref<36xf32, #tpu.memory_space<smem>>
    %198 = vector.broadcast %197 : f32 to vector<1x128xf32>
    %199 = arith.mulf %196, %198 : vector<1x128xf32>
    %200 = arith.addf %195, %199 : vector<1x128xf32>
    %201 = vector.extract_strided_slice %0 {offsets = [3, 0], sizes = [1, 128], strides = [1, 1]} : vector<6x128xf32> to vector<1x128xf32>
    %c33 = arith.constant 33 : index
    %202 = memref.load %arg1[%c33] : memref<36xf32, #tpu.memory_space<smem>>
    %203 = vector.broadcast %202 : f32 to vector<1x128xf32>
    %204 = arith.mulf %201, %203 : vector<1x128xf32>
    %205 = arith.addf %200, %204 : vector<1x128xf32>
    %206 = vector.extract_strided_slice %0 {offsets = [4, 0], sizes = [1, 128], strides = [1, 1]} : vector<6x128xf32> to vector<1x128xf32>
    %c34 = arith.constant 34 : index
    %207 = memref.load %arg1[%c34] : memref<36xf32, #tpu.memory_space<smem>>
    %208 = vector.broadcast %207 : f32 to vector<1x128xf32>
    %209 = arith.mulf %206, %208 : vector<1x128xf32>
    %210 = arith.addf %205, %209 : vector<1x128xf32>
    %211 = vector.extract_strided_slice %0 {offsets = [5, 0], sizes = [1, 128], strides = [1, 1]} : vector<6x128xf32> to vector<1x128xf32>
    %c35 = arith.constant 35 : index
    %212 = memref.load %arg1[%c35] : memref<36xf32, #tpu.memory_space<smem>>
    %213 = vector.broadcast %212 : f32 to vector<1x128xf32>
    %214 = arith.mulf %211, %213 : vector<1x128xf32>
    %215 = arith.addf %210, %214 : vector<1x128xf32>
    %c5_12 = arith.constant 5 : index
    %216 = memref.load %arg2[%c5_12] : memref<6xf32, #tpu.memory_space<smem>>
    %217 = vector.broadcast %216 : f32 to vector<1x128xf32>
    %218 = arith.addf %215, %217 : vector<1x128xf32>
    %219 = math.tanh %218 : vector<1x128xf32>
    %c5_13 = arith.constant 5 : index
    %220 = memref.load %arg3[%c5_13] : memref<6xf32, #tpu.memory_space<smem>>
    %221 = vector.broadcast %220 : f32 to vector<1x128xf32>
    %222 = arith.mulf %219, %221 : vector<1x128xf32>
    %223 = arith.addf %186, %222 : vector<1x128xf32>
    %c0_14 = arith.constant 0 : index
    %224 = memref.load %arg4[%c0_14] : memref<1xf32, #tpu.memory_space<smem>>
    %225 = vector.broadcast %224 : f32 to vector<1x128xf32>
    %226 = arith.addf %223, %225 : vector<1x128xf32>
    %227 = math.tanh %226 : vector<1x128xf32>
    %c0_15 = arith.constant 0 : index
    %c0_16 = arith.constant 0 : index
    %228 = vector.load %arg6[%c0_15, %c0_16] : memref<1x128xf32, #tpu.memory_space<vmem>>, vector<1x128xf32>
    tpu.vector_store %arg6[%c0_15, %c0_16], %227 {strides = array<i32>} : memref<1x128xf32, #tpu.memory_space<vmem>>, vector<1x128xf32>,
    return
  }
  func.func @transform_0(%arg0: i32) -> i32 {
    %c0_i32 = arith.constant 0 : i32
    %c0_i32_0 = arith.constant 0 : i32
    return %c0_i32 : i32
  }
  func.func @transform_1(%arg0: i32) -> i32 {
    %c0_i32 = arith.constant 0 : i32
    %c0_i32_0 = arith.constant 0 : i32
    return %c0_i32 : i32
  }
  func.func @transform_2(%arg0: i32) -> i32 {
    %c0_i32 = arith.constant 0 : i32
    %c0_i32_0 = arith.constant 0 : i32
    return %c0_i32 : i32
  }
  func.func @transform_3(%arg0: i32) -> i32 {
    %c0_i32 = arith.constant 0 : i32
    %c0_i32_0 = arith.constant 0 : i32
    return %c0_i32 : i32
  }
  func.func @transform_4(%arg0: i32) -> (i32, i32) {
    %c0_i32 = arith.constant 0 : i32
    %c0_i32_0 = arith.constant 0 : i32
    return %c0_i32, %arg0 : i32, i32
  }
  func.func @transform_5(%arg0: i32) -> (i32, i32) {
    %c0_i32 = arith.constant 0 : i32
    %c0_i32_0 = arith.constant 0 : i32
    return %c0_i32, %arg0 : i32, i32
  }
}

</mosaic_0001>

<llo_original>
// kernel: tpu_custom_call.1
$region0: #{tpu_custom_call.1}
  #allocation0 [shape = 'u32[]', space=smem, size = 0x4, offset = 0x4, fixed_abs, tag = 'smem constant byte address 0x4 - core index']
  #allocation1 [shape = 'u32[72,128]{1,0:T(1,128)}', space=vmem, size = 0x9000, scoped, tag = 'internal scratch']
  #allocation2 [shape = 'f32[1]{0:T(128)S(6)}', space=smem, size = 0x200, scoped, tag = 'scoped memory for tpu_custom_call.1']
  %s0 = inlined_call_operand.vmem [shape: f32[36], index: 0, kind: input, shape index: {}]
  %s1 = inlined_call_operand.vmem [shape: f32[6], index: 1, kind: input, shape index: {}]
  %s2 = inlined_call_operand.vmem [shape: f32[6], index: 2, kind: input, shape index: {}]
  %s3 = inlined_call_operand.<no memory space> [shape: f32[1], index: 3, kind: input, shape index: {}]
  %s4 = inlined_call_operand.hbm [shape: f32[6,128], index: 4, kind: input, shape index: {}]
  %s5 = inlined_call_operand.hbm [shape: f32[1,128], index: 5, kind: output, shape index: {}]
  %s6 = sld [smem:[#allocation0]]
  $region46: #{tpu_custom_call.1} parent=0
    _
  %s8 = ssub.s32 1, %s6
  %s9 = scalar_select 0, %s8, %s6
  %10 = sst [smem:[#allocation2]] %s3
  $region1: #{tpu_custom_call.1} parent=0
    #allocation3 [shape = 'u8[512]{0}', space=smem, size = 0x200, scoped, tag = 'input window, operand 0, single buffered']
    #allocation4 [shape = 's32[1]{0}', space=sflag, size = 0x4, scoped, tag = 'scoped memory for tpu_custom_call.1']
    #allocation5 [shape = 's32[1]{0}', space=sflag, size = 0x4, scoped, tag = 'scoped memory for tpu_custom_call.1']
    #allocation6 [shape = 's32[1]{0}', space=sflag, size = 0x4, scoped, tag = 'scoped memory for tpu_custom_call.1']
    #allocation7 [shape = 'u8[512]{0}', space=smem, size = 0x200, scoped, tag = 'input window, operand 1, single buffered']
    #allocation8 [shape = 's32[1]{0}', space=sflag, size = 0x4, scoped, tag = 'scoped memory for tpu_custom_call.1']
    #allocation9 [shape = 'u8[512]{0}', space=smem, size = 0x200, scoped, tag = 'input window, operand 2, single buffered']
    #allocation10 [shape = 'u8[4096]{0}', space=vmem, size = 0x1000, scoped, tag = 'input window, operand 4, single buffered']
    #allocation11 [shape = 'u8[512]{0}', space=vmem, size = 0x400, scoped, tag = 'output window, operand 0, single buffered']
    %11 = vsyncpa [#allocation6], 0
    %12 = vsyncpa [#allocation8], 0
    %13 = vsyncpa [#allocation4], 0
    %14 = vsyncpa [#allocation5], 0
    // Predicated region
    $region2: #{tpu_custom_call.1} parent=1 // pred_check
      _
    $region3: #{tpu_custom_call.1} parent=1 // pred_check_branch
      %16 = sbr.rel (0) target = $region5
    $region4: #{tpu_custom_call.1} parent=1 // pred_region
      %18 = vsyncadd [#allocation6], 0
      %s20 = sshll.u32 %s0, 4
      %s21 = int_to_ptr.vmem [resolvable:$true] %s20
      %23 = dma.vmem_to_smem %s21, 16, [#allocation3], [#allocation6]
    $region5: #{tpu_custom_call.1} parent=1 // pred_fallthru
      _
    // Predicated region
    $region6: #{tpu_custom_call.1} parent=1 // pred_check
      _
    $region7: #{tpu_custom_call.1} parent=1 // pred_check_branch
      %25 = sbr.rel (0) target = $region9
    $region8: #{tpu_custom_call.1} parent=1 // pred_region
      %27 = vsyncadd [#allocation8], 0
      %s29 = sshll.u32 %s1, 4
      %s30 = int_to_ptr.vmem [resolvable:$true] %s29
      %32 = dma.vmem_to_smem %s30, 16, [#allocation7], [#allocation8]
    $region9: #{tpu_custom_call.1} parent=1 // pred_fallthru
      _
    // Predicated region
    $region10: #{tpu_custom_call.1} parent=1 // pred_check
      _
    $region11: #{tpu_custom_call.1} parent=1 // pred_check_branch
      %34 = sbr.rel (0) target = $region13
    $region12: #{tpu_custom_call.1} parent=1 // pred_region
      %36 = vsyncadd [#allocation8], 0
      %s38 = sshll.u32 %s2, 4
      %s39 = int_to_ptr.vmem [resolvable:$true] %s38
      %41 = dma.vmem_to_smem %s39, 16, [#allocation9], [#allocation8]
    $region13: #{tpu_custom_call.1} parent=1 // pred_fallthru
      _
    // Predicated region
    $region14: #{tpu_custom_call.1} parent=1 // pred_check
      _
    $region15: #{tpu_custom_call.1} parent=1 // pred_check_branch
      %43 = sbr.rel (0) target = $region17
    $region16: #{tpu_custom_call.1} parent=1 // pred_region
      _
    $region17: #{tpu_custom_call.1} parent=1 // pred_fallthru
      _
    // Predicated region
    $region18: #{tpu_custom_call.1} parent=1 // pred_check
      _
    $region19: #{tpu_custom_call.1} parent=1 // pred_check_branch
      %45 = sbr.rel (0) target = $region21
    $region20: #{tpu_custom_call.1} parent=1 // pred_region
      %47 = vsyncadd [#allocation4], 0
      %s49 = sshll.u32 %s4, 4
      %s50 = int_to_ptr.hbm [resolvable:$true] %s49
      %s51 = sshll.u32 [#allocation10], 4
      %s52 = int_to_ptr.vmem [resolvable:$true] %s51
      %54 = dma.hbm_to_vmem [thread:$0]  %s50, 128, %s52, [#allocation4]
    $region21: #{tpu_custom_call.1} parent=1 // pred_fallthru
      _
    // Predicated region
    $region22: #{tpu_custom_call.1} parent=1 // pred_check
      _
    $region23: #{tpu_custom_call.1} parent=1 // pred_check_branch
      %56 = sbr.rel (0) target = $region25
    $region24: #{tpu_custom_call.1} parent=1 // pred_region
      %58 = dma.done [#allocation6], 16
    $region25: #{tpu_custom_call.1} parent=1 // pred_fallthru
      _
    // Predicated region
    $region26: #{tpu_custom_call.1} parent=1 // pred_check
      _
    $region27: #{tpu_custom_call.1} parent=1 // pred_check_branch
      %60 = sbr.rel (0) target = $region29
    $region28: #{tpu_custom_call.1} parent=1 // pred_region
      %62 = dma.done [#allocation8], 16
    $region29: #{tpu_custom_call.1} parent=1 // pred_fallthru
      _
    // Predicated region
    $region30: #{tpu_custom_call.1} parent=1 // pred_check
      _
    $region31: #{tpu_custom_call.1} parent=1 // pred_check_branch
      %64 = sbr.rel (0) target = $region33
    $region32: #{tpu_custom_call.1} parent=1 // pred_region
      %66 = dma.done [#allocation8], 16
    $region33: #{tpu_custom_call.1} parent=1 // pred_fallthru
      _
    // Predicated region
    $region34: #{tpu_custom_call.1} parent=1 // pred_check
      _
    $region35: #{tpu_custom_call.1} parent=1 // pred_check_branch
      %68 = sbr.rel (0) target = $region37
    $region36: #{tpu_custom_call.1} parent=1 // pred_region
      %70 = dma.done [#allocation4], 128
    $region37: #{tpu_custom_call.1} parent=1 // pred_fallthru
      _
    %71 = sfence
    %v72 = vld [vmem:[#allocation10] sm:$0x3f]
    %s73 = sld [smem:[#allocation3]]
    %v74 = vstv %s73
    %v75 = vmul.f32 %v72, %v74
    %s76 = sld [smem:[#allocation3 + $0x1]]
    %v77 = vstv %s76
    %v78 = vmul.f32 %v72, %v77
    %v80 = vrot.slane %v78, 1
    %v82 = vadd.f32 %v75, %v80
    %s83 = sld [smem:[#allocation3 + $0x2]]
    %v84 = vstv %s83
    %v85 = vmul.f32 %v72, %v84
    %v87 = vrot.slane %v85, 2
    %v89 = vadd.f32 %v82, %v87
    %s90 = sld [smem:[#allocation3 + $0x3]]
    %v91 = vstv %s90
    %v92 = vmul.f32 %v72, %v91
    %v94 = vrot.slane %v92, 3
    %v96 = vadd.f32 %v89, %v94
    %s97 = sld [smem:[#allocation3 + $0x4]]
    %v98 = vstv %s97
    %v99 = vmul.f32 %v72, %v98
    %v101 = vrot.slane %v99, 4
    %v103 = vadd.f32 %v96, %v101
    %s104 = sld [smem:[#allocation3 + $0x5]]
    %v105 = vstv %s104
    %v106 = vmul.f32 %v72, %v105
    %v108 = vrot.slane %v106, 5
    %v110 = vadd.f32 %v103, %v108
    %s111 = sld [smem:[#allocation7]]
    %v112 = vstv %s111
    %v113 = vadd.f32 %v110, %v112
    %v114 = vtanh.pop %v113
    %s115 = sld [smem:[#allocation9]]
    %v116 = vstv %s115
    %v117 = vmul.f32 %v114, %v116
    %v118 = vadd.f32 %v117, 0.0
    %s119 = sld [smem:[#allocation3 + $0x6]]
    %v120 = vstv %s119
    %v121 = vmul.f32 %v72, %v120
    %s122 = sld [smem:[#allocation3 + $0x7]]
    %v123 = vstv %s122
    %v124 = vmul.f32 %v72, %v123
    %v126 = vrot.slane %v124, 1
    %v128 = vadd.f32 %v121, %v126
    %s129 = sld [smem:[#allocation3 + $0x8]]
    %v130 = vstv %s129
    %v131 = vmul.f32 %v72, %v130
    %v133 = vrot.slane %v131, 2
    %v135 = vadd.f32 %v128, %v133
    %s136 = sld [smem:[#allocation3 + $0x9]]
    %v137 = vstv %s136
    %v138 = vmul.f32 %v72, %v137
    %v140 = vrot.slane %v138, 3
    %v142 = vadd.f32 %v135, %v140
    %s143 = sld [smem:[#allocation3 + $0xa]]
    %v144 = vstv %s143
    %v145 = vmul.f32 %v72, %v144
    %v147 = vrot.slane %v145, 4
    %v149 = vadd.f32 %v142, %v147
    %s150 = sld [smem:[#allocation3 + $0xb]]
    %v151 = vstv %s150
    %v152 = vmul.f32 %v72, %v151
    %v154 = vrot.slane %v152, 5
    %v156 = vadd.f32 %v149, %v154
    %s157 = sld [smem:[#allocation7 + $0x1]]
    %v158 = vstv %s157
    %v159 = vadd.f32 %v156, %v158
    %v160 = vtanh.pop %v159
    %s161 = sld [smem:[#allocation9 + $0x1]]
    %v162 = vstv %s161
    %v163 = vmul.f32 %v160, %v162
    %v164 = vadd.f32 %v118, %v163
    %s165 = sld [smem:[#allocation3 + $0xc]]
    %v166 = vstv %s165
    %v167 = vmul.f32 %v72, %v166
    %s168 = sld [smem:[#allocation3 + $0xd]]
    %v169 = vstv %s168
    %v170 = vmul.f32 %v72, %v169
    %v172 = vrot.slane %v170, 1
    %v174 = vadd.f32 %v167, %v172
    %s175 = sld [smem:[#allocation3 + $0xe]]
    %v176 = vstv %s175
    %v177 = vmul.f32 %v72, %v176
    %v179 = vrot.slane %v177, 2
    %v181 = vadd.f32 %v174, %v179
    %s182 = sld [smem:[#allocation3 + $0xf]]
    %v183 = vstv %s182
    %v184 = vmul.f32 %v72, %v183
    %v186 = vrot.slane %v184, 3
    %v188 = vadd.f32 %v181, %v186
    %s189 = sld [smem:[#allocation3 + $0x10]]
    %v190 = vstv %s189
    %v191 = vmul.f32 %v72, %v190
    %v193 = vrot.slane %v191, 4
    %v195 = vadd.f32 %v188, %v193
    %s196 = sld [smem:[#allocation3 + $0x11]]
    %v197 = vstv %s196
    %v198 = vmul.f32 %v72, %v197
    %v200 = vrot.slane %v198, 5
    %v202 = vadd.f32 %v195, %v200
    %s203 = sld [smem:[#allocation7 + $0x2]]
    %v204 = vstv %s203
    %v205 = vadd.f32 %v202, %v204
    %v206 = vtanh.pop %v205
    %s207 = sld [smem:[#allocation9 + $0x2]]
    %v208 = vstv %s207
    %v209 = vmul.f32 %v206, %v208
    %v210 = vadd.f32 %v164, %v209
    %s211 = sld [smem:[#allocation3 + $0x12]]
    %v212 = vstv %s211
    %v213 = vmul.f32 %v72, %v212
    %s214 = sld [smem:[#allocation3 + $0x13]]
    %v215 = vstv %s214
    %v216 = vmul.f32 %v72, %v215
    %v218 = vrot.slane %v216, 1
    %v220 = vadd.f32 %v213, %v218
    %s221 = sld [smem:[#allocation3 + $0x14]]
    %v222 = vstv %s221
    %v223 = vmul.f32 %v72, %v222
    %v225 = vrot.slane %v223, 2
    %v227 = vadd.f32 %v220, %v225
    %s228 = sld [smem:[#allocation3 + $0x15]]
    %v229 = vstv %s228
    %v230 = vmul.f32 %v72, %v229
    %v232 = vrot.slane %v230, 3
    %v234 = vadd.f32 %v227, %v232
    %s235 = sld [smem:[#allocation3 + $0x16]]
    %v236 = vstv %s235
    %v237 = vmul.f32 %v72, %v236
    %v239 = vrot.slane %v237, 4
    %v241 = vadd.f32 %v234, %v239
    %s242 = sld [smem:[#allocation3 + $0x17]]
    %v243 = vstv %s242
    %v244 = vmul.f32 %v72, %v243
    %v246 = vrot.slane %v244, 5
    %v248 = vadd.f32 %v241, %v246
    %s249 = sld [smem:[#allocation7 + $0x3]]
    %v250 = vstv %s249
    %v251 = vadd.f32 %v248, %v250
    %v252 = vtanh.pop %v251
    %s253 = sld [smem:[#allocation9 + $0x3]]
    %v254 = vstv %s253
    %v255 = vmul.f32 %v252, %v254
    %v256 = vadd.f32 %v210, %v255
    %s257 = sld [smem:[#allocation3 + $0x18]]
    %v258 = vstv %s257
    %v259 = vmul.f32 %v72, %v258
    %s260 = sld [smem:[#allocation3 + $0x19]]
    %v261 = vstv %s260
    %v262 = vmul.f32 %v72, %v261
    %v264 = vrot.slane %v262, 1
    %v266 = vadd.f32 %v259, %v264
    %s267 = sld [smem:[#allocation3 + $0x1a]]
    %v268 = vstv %s267
    %v269 = vmul.f32 %v72, %v268
    %v271 = vrot.slane %v269, 2
    %v273 = vadd.f32 %v266, %v271
    %s274 = sld [smem:[#allocation3 + $0x1b]]
    %v275 = vstv %s274
    %v276 = vmul.f32 %v72, %v275
    %v278 = vrot.slane %v276, 3
    %v280 = vadd.f32 %v273, %v278
    %s281 = sld [smem:[#allocation3 + $0x1c]]
    %v282 = vstv %s281
    %v283 = vmul.f32 %v72, %v282
    %v285 = vrot.slane %v283, 4
    %v287 = vadd.f32 %v280, %v285
    %s288 = sld [smem:[#allocation3 + $0x1d]]
    %v289 = vstv %s288
    %v290 = vmul.f32 %v72, %v289
    %v292 = vrot.slane %v290, 5
    %v294 = vadd.f32 %v287, %v292
    %s295 = sld [smem:[#allocation7 + $0x4]]
    %v296 = vstv %s295
    %v297 = vadd.f32 %v294, %v296
    %v298 = vtanh.pop %v297
    %s299 = sld [smem:[#allocation9 + $0x4]]
    %v300 = vstv %s299
    %v301 = vmul.f32 %v298, %v300
    %v302 = vadd.f32 %v256, %v301
    %s303 = sld [smem:[#allocation3 + $0x1e]]
    %v304 = vstv %s303
    %v305 = vmul.f32 %v72, %v304
    %s306 = sld [smem:[#allocation3 + $0x1f]]
    %v307 = vstv %s306
    %v308 = vmul.f32 %v72, %v307
    %v310 = vrot.slane %v308, 1
    %v312 = vadd.f32 %v305, %v310
    %s313 = sld [smem:[#allocation3 + $0x20]]
    %v314 = vstv %s313
    %v315 = vmul.f32 %v72, %v314
    %v317 = vrot.slane %v315, 2
    %v319 = vadd.f32 %v312, %v317
    %s320 = sld [smem:[#allocation3 + $0x21]]
    %v321 = vstv %s320
    %v322 = vmul.f32 %v72, %v321
    %v324 = vrot.slane %v322, 3
    %v326 = vadd.f32 %v319, %v324
    %s327 = sld [smem:[#allocation3 + $0x22]]
    %v328 = vstv %s327
    %v329 = vmul.f32 %v72, %v328
    %v331 = vrot.slane %v329, 4
    %v333 = vadd.f32 %v326, %v331
    %s334 = sld [smem:[#allocation3 + $0x23]]
    %v335 = vstv %s334
    %v336 = vmul.f32 %v72, %v335
    %v338 = vrot.slane %v336, 5
    %v340 = vadd.f32 %v333, %v338
    %s341 = sld [smem:[#allocation7 + $0x5]]
    %v342 = vstv %s341
    %v343 = vadd.f32 %v340, %v342
    %v344 = vtanh.pop %v343
    %s345 = sld [smem:[#allocation9 + $0x5]]
    %v346 = vstv %s345
    %v347 = vmul.f32 %v344, %v346
    %v348 = vadd.f32 %v302, %v347
    %s349 = sld [smem:[#allocation2]]
    %v350 = vstv %s349
    %v351 = vadd.f32 %v348, %v350
    %v352 = vtanh.pop %v351
    %353 = vst [vmem:[#allocation11] sm:$0x1] %v352
    // Predicated region
    $region38: #{tpu_custom_call.1} parent=1 // pred_check
      _
    $region39: #{tpu_custom_call.1} parent=1 // pred_check_branch
      %355 = sbr.rel (0) target = $region41
    $region40: #{tpu_custom_call.1} parent=1 // pred_region
      %357 = vsyncadd [#allocation5], 0
      %s359 = sshll.u32 [#allocation11], 4
      %s360 = int_to_ptr.vmem [resolvable:$true] %s359
      %s361 = sshll.u32 %s5, 4
      %s362 = int_to_ptr.hbm [resolvable:$true] %s361
      %364 = dma.vmem_to_hbm [thread:$0]  %s360, 16, %s362, [#allocation5]
    $region41: #{tpu_custom_call.1} parent=1 // pred_fallthru
      _
    // Predicated region
    $region42: #{tpu_custom_call.1} parent=1 // pred_check
      _
    $region43: #{tpu_custom_call.1} parent=1 // pred_check_branch
      %366 = sbr.rel (0) target = $region45
    $region44: #{tpu_custom_call.1} parent=1 // pred_region
      %368 = dma.done [#allocation5], 16
    $region45: #{tpu_custom_call.1} parent=1 // pred_fallthru
      _
    %369 = vsyncpa [#allocation4], 1
    %370 = vsyncpa [#allocation5], 1
    %371 = vsyncpa [#allocation6], 1
    %372 = vsyncpa [#allocation8], 1

</llo_original>
